<compile_context>
chip_gen: v5e
topology: v5e:2x2
jax: 0.10.0
libtpu: 0.0.40
codegen_flags: <defaults>
</compile_context>

<pallas_src>
import functools
import math

import jax
import jax.numpy as jnp
from jax.experimental import pallas as pl
from jax.experimental.pallas import tpu as pltpu


def _round_up(x, m):
    return (x + m - 1) // m * m


def _sublane_multiple(dtype):
    # Min second-to-last-dim granularity: 8 for 4-byte, 16 for 2-byte, 32 for 1-byte.
    return max(8, 32 // jnp.dtype(dtype).itemsize)


def _icm_inverse_kernel(*refs, out_size, need_softmax, split_input):
    if split_input:
        (x1_ref, x2_ref, w1a_ref, w1b_ref, b1_ref,
         w2_ref, b2_ref, w3_ref, b3_ref, o_ref) = refs
        w_dtype = w1a_ref.dtype
        # Fused concat: two partial matmuls, operands cast to the weight dtype
        # so bf16 params run the bf16 MXU path; accumulate in f32.
        h1 = (jnp.dot(x1_ref[...].astype(w_dtype), w1a_ref[...],
                      preferred_element_type=jnp.float32)
              + jnp.dot(x2_ref[...].astype(w_dtype), w1b_ref[...],
                        preferred_element_type=jnp.float32))
    else:
        (x_ref, w1_ref, b1_ref, w2_ref, b2_ref, w3_ref, b3_ref, o_ref) = refs
        w_dtype = w1_ref.dtype
        h1 = jnp.dot(x_ref[...].astype(w_dtype), w1_ref[...],
                     preferred_element_type=jnp.float32)

    # Layer 1: bias + ReLU (f32).
    h1 = jnp.maximum(h1 + b1_ref[...].astype(jnp.float32), 0.0)

    # Layer 2: Linear + ReLU.
    h2 = (jnp.dot(h1.astype(w2_ref.dtype), w2_ref[...],
                  preferred_element_type=jnp.float32)
          + b2_ref[...].astype(jnp.float32))
    h2 = jnp.maximum(h2, 0.0)

    # Layer 3: output head (lane-padded to a multiple of 128).
    logits = (jnp.dot(h2.astype(w3_ref.dtype), w3_ref[...],
                      preferred_element_type=jnp.float32)
              + b3_ref[...].astype(jnp.float32))

    if need_softmax:
        if out_size < logits.shape[-1]:
            # Mask padded lanes to -inf so they contribute 0 to the softmax.
            lane = jax.lax.broadcasted_iota(jnp.int32, logits.shape, 1)
            logits = jnp.where(lane < out_size, logits, -jnp.inf)
        m = jnp.max(logits, axis=-1, keepdims=True)
        e = jnp.exp(logits - m)                        # exp(-inf) == 0 in pad lanes
        denom = jnp.sum(e, axis=-1, keepdims=True)
        # Exact reciprocal on the EUP (approx=False -> rows sum to 1 to ~1e-6,
        # safe if probabilities feed a log/NLL loss downstream).
        out = e * pl.reciprocal(denom, approx=False)
    else:
        out = logits

    o_ref[...] = out.astype(o_ref.dtype)


def linear_inverse_model_forward(enc_obs_1, enc_obs_2, params, out_dim,
                                 action_dtype="discrete", block_batch=None,
                                 out_dtype=None):
    """Pallas-backed forward of LinearInverseModel.

    enc_obs_1, enc_obs_2: (B, d1), (B, d2) with d1 + d2 == in_dim
    params: dict with w1 (in_dim, H), b1 (1, H), w2 (H, H), b2 (1, H),
            w3 (H, out_size), b3 (1, out_size)   (weights pre-transposed
            relative to torch's (out, in) storage)
    out_dtype: output dtype; defaults to the input dtype.  Pass jnp.bfloat16
               to halve the output HBM stream if downstream tolerates it.
    """
    need_softmax = (action_dtype == "discrete")
    if not isinstance(out_dim, tuple):
        out_dim = (out_dim,)
    out_size = math.prod(out_dim)

    B, d1 = enc_obs_1.shape
    _, d2 = enc_obs_2.shape
    w1, b1 = params["w1"], params["b1"]
    w2, b2 = params["w2"], params["b2"]
    w3, b3 = params["w3"], params["b3"]
    H = w1.shape[1]
    assert w1.shape[0] == d1 + d2

    out_dtype = jnp.dtype(out_dtype) if out_dtype is not None else enc_obs_1.dtype

    # --- Lane-pad feature dims (hidden, out) to multiples of 128.  Zero pads
    # are exact: padded hidden lanes stay 0 through ReLU; padded logit lanes
    # are masked to -inf inside the kernel.
    h_pad = _round_up(H, 128)
    out_pad = _round_up(out_size, 128)

    b1p = jnp.pad(b1.reshape(1, H), ((0, 0), (0, h_pad - H)))
    w2p = jnp.pad(w2, ((0, h_pad - H), (0, h_pad - H)))
    b2p = jnp.pad(b2.reshape(1, H), ((0, 0), (0, h_pad - H)))
    w3p = jnp.pad(w3, ((0, h_pad - H), (0, out_pad - out_size)))
    b3p = jnp.pad(b3.reshape(1, out_size), ((0, 0), (0, out_pad - out_size)))

    # Keep the fused-concat split only when each half is lane-wide enough for
    # full MXU pushes; for small encodings, one XLA concat + one K=(d1+d2)
    # matmul needs fewer DMA streams and fewer half-empty MXU pushes.
    split_input = (d1 >= 128 and d2 >= 128)
    if split_input:
        w1a = jnp.pad(w1[:d1], ((0, 0), (0, h_pad - H)))
        w1b = jnp.pad(w1[d1:], ((0, 0), (0, h_pad - H)))
        weight_arrays = (w1a, w1b, b1p, w2p, b2p, w3p, b3p)
    else:
        w1p = jnp.pad(w1, ((0, 0), (0, h_pad - H)))
        weight_arrays = (w1p, b1p, w2p, b2p, w3p, b3p)

    # --- Batch tiling.  Sublane multiple depends on the narrowest dtype that
    # touches the second-to-last dim (8 f32 / 16 bf16 / 32 int8).
    sub_mult = max(_sublane_multiple(enc_obs_1.dtype), _sublane_multiple(out_dtype))
    if block_batch is None:
        if h_pad <= 512:
            block_batch = 1024   # tiny MLP: amortize per-grid-step overhead
        elif h_pad <= 1024:
            block_batch = 512
        else:
            block_batch = 256    # keep f32 intermediates within v7x's 32 MiB scoped VMEM
    b_min = _round_up(B, sub_mult)
    tb = min(_round_up(block_batch, sub_mult), b_min)
    # Keep >=2 grid tiles whenever possible so "parallel" gives v7x's second
    # TensorCore work (harmless on v5e/v6e single-TC parts).
    if b_min >= 2 * sub_mult:
        tb = min(tb, _round_up(pl.cdiv(b_min, 2), sub_mult))
    b_pad = _round_up(b_min, tb)

    pad_rows = ((0, b_pad - B), (0, 0))
    if split_input:
        x1 = jnp.pad(enc_obs_1, pad_rows) if b_pad != B else enc_obs_1
        x2 = jnp.pad(enc_obs_2, pad_rows) if b_pad != B else enc_obs_2
        kernel_inputs = (x1, x2) + weight_arrays
        feat_specs = [pl.BlockSpec((tb, d1), lambda i: (i, 0)),
                      pl.BlockSpec((tb, d2), lambda i: (i, 0))]
    else:
        x = jnp.concatenate([enc_obs_1, enc_obs_2], axis=1)
        if b_pad != B:
            x = jnp.pad(x, pad_rows)
        kernel_inputs = (x,) + weight_arrays
        feat_specs = [pl.BlockSpec((tb, d1 + d2), lambda i: (i, 0))]

    # --- Explicit scoped-VMEM budget: weights (worst case double-buffered) +
    # double-buffered activation/output tiles + f32 h1/h2/logits intermediates.
    x_itemsize = jnp.dtype(enc_obs_1.dtype).itemsize
    weights_bytes = sum(int(a.size) * a.dtype.itemsize for a in weight_arrays)
    io_bytes = (2 * tb * (d1 + d2) * x_itemsize
                + 2 * tb * out_pad * out_dtype.itemsize)
    interm_bytes = tb * (3 * h_pad + out_pad) * 4
    vmem_limit = int(min(max(1.3 * (2 * weights_bytes + io_bytes + interm_bytes)
                             + (4 << 20), 32 << 20), 56 << 20))

    cparams = pltpu.CompilerParams(
        dimension_semantics=("parallel",),
        vmem_limit_bytes=vmem_limit)

    kernel = functools.partial(_icm_inverse_kernel, out_size=out_size,
                               need_softmax=need_softmax,
                               split_input=split_input)
    grid = (b_pad // tb,)
    out_shape = jax.ShapeDtypeStruct((b_pad, out_pad), out_dtype)
    out_spec = pl.BlockSpec((tb, out_pad), lambda i: (i, 0))

    def _weight_spec(arr, single_buffer):
        # Constant block index -> fetched once, VMEM-resident across all batch
        # tiles.  Single-buffering halves their VMEM footprint.
        if single_buffer:
            return pl.BlockSpec(arr.shape, lambda i: (0, 0),
                                pipeline_mode=pl.Buffered(1))
        return pl.BlockSpec(arr.shape, lambda i: (0, 0))

    def _run(single_buffer_weights):
        in_specs = list(feat_specs) + [_weight_spec(a, single_buffer_weights)
                                       for a in weight_arrays]
        return pl.pallas_call(
            kernel,
            out_shape=out_shape,
            grid=grid,
            in_specs=in_specs,
            out_specs=out_spec,
            compiler_params=cparams,
        )(*kernel_inputs)

    try:
        out = _run(True)
    except Exception:
        # Fallback: some Mosaic builds reject Buffered(1); default (double)
        # buffering is functionally identical, just uses more VMEM.
        out = _run(False)

    # Glue: drop batch/lane padding (only when padding exists) and reshape.
    # TODO(synk): if the consumer can take the padded (b_pad, out_pad) layout,
    # skip this slice to save a full read+write pass over the output.
    if b_pad != B or out_pad != out_size:
        out = out[:B, :out_size]
    return out.reshape((B,) + out_dim)


def init_params(key, in_dim, hidden_size, out_size, out_init=0.01,
                dtype=jnp.float32):
    """Deterministic synthetic init (mirrors init_layer shapes; weights stored
    pre-transposed as (in, out)).  dtype=jnp.bfloat16 runs the full-rate bf16
    MXU path on all of v5e / v6e / v7x."""
    k1, k2, k3 = jax.random.split(key, 3)
    w1 = (jax.random.normal(k1, (in_dim, hidden_size), jnp.float32)
          * (1.0 / jnp.sqrt(in_dim))).astype(dtype)
    w2 = (jax.random.normal(k2, (hidden_size, hidden_size), jnp.float32)
          * (1.0 / jnp.sqrt(hidden_size))).astype(dtype)
    w3 = (jax.random.normal(k3, (hidden_size, out_size), jnp.float32)
          * out_init).astype(dtype)
    b1 = jnp.zeros((1, hidden_size), dtype)
    b2 = jnp.zeros((1, hidden_size), dtype)
    b3 = jnp.zeros((1, out_size), dtype)
    return dict(w1=w1, b1=b1, w2=w2, b2=b2, w3=w3, b3=b3)


def _reference_forward(enc_obs_1, enc_obs_2, params, out_dim,
                       action_dtype="discrete"):
    """Pure-JAX reference mirroring the PyTorch module."""
    if not isinstance(out_dim, tuple):
        out_dim = (out_dim,)
    x = jnp.concatenate([enc_obs_1, enc_obs_2], axis=1).astype(jnp.float32)
    h1 = jnp.maximum(x @ params["w1"].astype(jnp.float32)
                     + params["b1"].astype(jnp.float32), 0.0)
    h2 = jnp.maximum(h1 @ params["w2"].astype(jnp.float32)
                     + params["b2"].astype(jnp.float32), 0.0)
    logits = (h2 @ params["w3"].astype(jnp.float32)
              + params["b3"].astype(jnp.float32))
    out = jax.nn.softmax(logits, axis=-1) if action_dtype == "discrete" else logits
    return out.reshape((x.shape[0],) + out_dim)


if __name__ == "__main__":
    # Small shapes consistent with the module's forward:
    #   enc_obs_1, enc_obs_2: (B, 16) each -> concatenated in_dim = 32
    #   hidden_size = 32, out_dim = 8 (discrete actions -> softmax)
    batch = 2
    enc_dim = 16
    in_dim = 2 * enc_dim
    hidden_size = 32
    out_dim = 8  # action space size

    key = jax.random.PRNGKey(0)
    k_obs1, k_obs2, k_params = jax.random.split(key, 3)

    enc_obs_1 = jax.random.normal(k_obs1, (batch, enc_dim), jnp.float32)
    enc_obs_2 = jax.random.normal(k_obs2, (batch, enc_dim), jnp.float32)
    params = init_params(k_params, in_dim, hidden_size, out_dim, out_init=0.01)

    out = linear_inverse_model_forward(enc_obs_1, enc_obs_2, params, out_dim,
                                       action_dtype="discrete")
    jax.block_until_ready(out)

    # Sanity: shape, softmax rows sum to 1, and match the pure-JAX reference
    # of the PyTorch module.
    ref = _reference_forward(enc_obs_1, enc_obs_2, params, out_dim, "discrete")
    assert out.shape == (batch, out_dim)
    assert jnp.allclose(jnp.sum(out, axis=-1), 1.0, atol=1e-3)
    assert jnp.allclose(out, ref, atol=2e-3, rtol=2e-3)

    print("KERNEL_OK")
</pallas_src>

<mosaic_0001>
module attributes {stable_mosaic.version = 11 : i64} {
  func.func @_icm_inverse_kernel(%arg0: i32, %arg1: memref<8x32xf32, #tpu.memory_space<vmem>>, %arg2: memref<32x128xf32, #tpu.memory_space<vmem>>, %arg3: memref<1x128xf32, #tpu.memory_space<vmem>>, %arg4: memref<128x128xf32, #tpu.memory_space<vmem>>, %arg5: memref<1x128xf32, #tpu.memory_space<vmem>>, %arg6: memref<128x128xf32, #tpu.memory_space<vmem>>, %arg7: memref<1x128xf32, #tpu.memory_space<vmem>>, %arg8: memref<8x128xf32, #tpu.memory_space<vmem>>) attributes {dimension_semantics = [#tpu.dimension_semantics<parallel>], iteration_bounds = array<i64: 1>, scalar_prefetch = 0 : i64, scratch_operands = 0 : i64, tpu.core_type = #tpu.core_type<tc>, window_params = [{transform_indices = @transform_0, window_bounds = array<i64: 8, 32>}, {pipeline_mode = #tpu.pipeline_mode<synchronous>, transform_indices = @transform_1, window_bounds = array<i64: 32, 128>}, {pipeline_mode = #tpu.pipeline_mode<synchronous>, transform_indices = @transform_2, window_bounds = array<i64: 1, 128>}, {pipeline_mode = #tpu.pipeline_mode<synchronous>, transform_indices = @transform_3, window_bounds = array<i64: 128, 128>}, {pipeline_mode = #tpu.pipeline_mode<synchronous>, transform_indices = @transform_4, window_bounds = array<i64: 1, 128>}, {pipeline_mode = #tpu.pipeline_mode<synchronous>, transform_indices = @transform_5, window_bounds = array<i64: 128, 128>}, {pipeline_mode = #tpu.pipeline_mode<synchronous>, transform_indices = @transform_6, window_bounds = array<i64: 1, 128>}, {transform_indices = @transform_7, window_bounds = array<i64: 8, 128>}]} {
    %c0 = arith.constant 0 : index
    %c0_0 = arith.constant 0 : index
    %0 = vector.load %arg1[%c0, %c0_0] : memref<8x32xf32, #tpu.memory_space<vmem>>, vector<8x32xf32>
    %c0_1 = arith.constant 0 : index
    %c0_2 = arith.constant 0 : index
    %1 = vector.load %arg2[%c0_1, %c0_2] : memref<32x128xf32, #tpu.memory_space<vmem>>, vector<32x128xf32>
    %cst = arith.constant dense<0.000000e+00> : vector<8x128xf32>
    %2 = tpu.matmul %0, %1, %cst {dimension_numbers = #tpu.dot_dimension_numbers<[1], [0], [0], [1], [0, 0, 1, 1], [], []>} : vector<8x32xf32>, vector<32x128xf32>, vector<8x128xf32> -> vector<8x128xf32>
    %c0_3 = arith.constant 0 : index
    %c0_4 = arith.constant 0 : index
    %3 = vector.load %arg3[%c0_3, %c0_4] : memref<1x128xf32, #tpu.memory_space<vmem>>, vector<1x128xf32>
    %4 = vector.broadcast %3 : vector<1x128xf32> to vector<8x128xf32>
    %5 = arith.addf %2, %4 : vector<8x128xf32>
    %cst_5 = arith.constant 0.000000e+00 : f32
    %6 = vector.broadcast %cst_5 : f32 to vector<8x128xf32>
    %7 = arith.maximumf %5, %6 : vector<8x128xf32>
    %c0_6 = arith.constant 0 : index
    %c0_7 = arith.constant 0 : index
    %8 = vector.load %arg4[%c0_6, %c0_7] : memref<128x128xf32, #tpu.memory_space<vmem>>, vector<128x128xf32>
    %cst_8 = arith.constant dense<0.000000e+00> : vector<8x128xf32>
    %9 = tpu.matmul %7, %8, %cst_8 {dimension_numbers = #tpu.dot_dimension_numbers<[1], [0], [0], [1], [0, 0, 1, 1], [], []>} : vector<8x128xf32>, vector<128x128xf32>, vector<8x128xf32> -> vector<8x128xf32>
    %c0_9 = arith.constant 0 : index
    %c0_10 = arith.constant 0 : index
    %10 = vector.load %arg5[%c0_9, %c0_10] : memref<1x128xf32, #tpu.memory_space<vmem>>, vector<1x128xf32>
    %11 = vector.broadcast %10 : vector<1x128xf32> to vector<8x128xf32>
    %12 = arith.addf %9, %11 : vector<8x128xf32>
    %cst_11 = arith.constant 0.000000e+00 : f32
    %13 = vector.broadcast %cst_11 : f32 to vector<8x128xf32>
    %14 = arith.maximumf %12, %13 : vector<8x128xf32>
    %c0_12 = arith.constant 0 : index
    %c0_13 = arith.constant 0 : index
    %15 = vector.load %arg6[%c0_12, %c0_13] : memref<128x128xf32, #tpu.memory_space<vmem>>, vector<128x128xf32>
    %cst_14 = arith.constant dense<0.000000e+00> : vector<8x128xf32>
    %16 = tpu.matmul %14, %15, %cst_14 {dimension_numbers = #tpu.dot_dimension_numbers<[1], [0], [0], [1], [0, 0, 1, 1], [], []>} : vector<8x128xf32>, vector<128x128xf32>, vector<8x128xf32> -> vector<8x128xf32>
    %c0_15 = arith.constant 0 : index
    %c0_16 = arith.constant 0 : index
    %17 = vector.load %arg7[%c0_15, %c0_16] : memref<1x128xf32, #tpu.memory_space<vmem>>, vector<1x128xf32>
    %18 = vector.broadcast %17 : vector<1x128xf32> to vector<8x128xf32>
    %19 = arith.addf %16, %18 : vector<8x128xf32>
    %20 = tpu.iota {dimensions = array<i32: 1>} : vector<8x128xi32>
    %c8_i32 = arith.constant 8 : i32
    %21 = vector.broadcast %c8_i32 : i32 to vector<8x128xi32>
    %22 = arith.cmpi slt, %20, %21 : vector<8x128xi32>
    %cst_17 = arith.constant 0xFF800000 : f32
    %23 = vector.broadcast %cst_17 : f32 to vector<8x128xf32>
    %24 = arith.select %22, %19, %23 : vector<8x128xi1>, vector<8x128xf32>
    %cst_18 = arith.constant dense<0xFF800000> : vector<8xf32>
    %25 = vector.multi_reduction <maximumf>, %24, %cst_18 [1] : vector<8x128xf32> to vector<8xf32>
    %26 = vector.shape_cast %25 : vector<8xf32> to vector<8x1xf32>
    %27 = vector.broadcast %26 : vector<8x1xf32> to vector<8x128xf32>
    %28 = arith.subf %24, %27 : vector<8x128xf32>
    %29 = math.exp %28 : vector<8x128xf32>
    %cst_19 = arith.constant dense<0.000000e+00> : vector<8xf32>
    %30 = vector.multi_reduction <add>, %29, %cst_19 [1] : vector<8x128xf32> to vector<8xf32>
    %31 = vector.shape_cast %30 : vector<8xf32> to vector<8x1xf32>
    %32 = tpu.reciprocal %31 : vector<8x1xf32> -> vector<8x1xf32>
    %33 = vector.broadcast %32 : vector<8x1xf32> to vector<8x128xf32>
    %34 = arith.mulf %29, %33 : vector<8x128xf32>
    %c0_20 = arith.constant 0 : index
    %c0_21 = arith.constant 0 : index
    %35 = vector.load %arg8[%c0_20, %c0_21] : memref<8x128xf32, #tpu.memory_space<vmem>>, vector<8x128xf32>
    tpu.vector_store %arg8[%c0_20, %c0_21], %34 {strides = array<i32>} : memref<8x128xf32, #tpu.memory_space<vmem>>, vector<8x128xf32>,
    return
  }
  func.func @transform_0(%arg0: i32) -> (i32, i32) {
    %c0_i32 = arith.constant 0 : i32
    %c0_i32_0 = arith.constant 0 : i32
    return %arg0, %c0_i32 : i32, i32
  }
  func.func @transform_1(%arg0: i32) -> (i32, i32) {
    %c0_i32 = arith.constant 0 : i32
    %c0_i32_0 = arith.constant 0 : i32
    %c0_i32_1 = arith.constant 0 : i32
    return %c0_i32, %c0_i32_0 : i32, i32
  }
  func.func @transform_2(%arg0: i32) -> (i32, i32) {
    %c0_i32 = arith.constant 0 : i32
    %c0_i32_0 = arith.constant 0 : i32
    %c0_i32_1 = arith.constant 0 : i32
    return %c0_i32, %c0_i32_0 : i32, i32
  }
  func.func @transform_3(%arg0: i32) -> (i32, i32) {
    %c0_i32 = arith.constant 0 : i32
    %c0_i32_0 = arith.constant 0 : i32
    %c0_i32_1 = arith.constant 0 : i32
    return %c0_i32, %c0_i32_0 : i32, i32
  }
  func.func @transform_4(%arg0: i32) -> (i32, i32) {
    %c0_i32 = arith.constant 0 : i32
    %c0_i32_0 = arith.constant 0 : i32
    %c0_i32_1 = arith.constant 0 : i32
    return %c0_i32, %c0_i32_0 : i32, i32
  }
  func.func @transform_5(%arg0: i32) -> (i32, i32) {
    %c0_i32 = arith.constant 0 : i32
    %c0_i32_0 = arith.constant 0 : i32
    %c0_i32_1 = arith.constant 0 : i32
    return %c0_i32, %c0_i32_0 : i32, i32
  }
  func.func @transform_6(%arg0: i32) -> (i32, i32) {
    %c0_i32 = arith.constant 0 : i32
    %c0_i32_0 = arith.constant 0 : i32
    %c0_i32_1 = arith.constant 0 : i32
    return %c0_i32, %c0_i32_0 : i32, i32
  }
  func.func @transform_7(%arg0: i32) -> (i32, i32) {
    %c0_i32 = arith.constant 0 : i32
    %c0_i32_0 = arith.constant 0 : i32
    return %arg0, %c0_i32 : i32, i32
  }
}

module attributes {stable_mosaic.version = 11 : i64} {
  func.func @_icm_inverse_kernel(%arg0: i32, %arg1: memref<8x32xf32, #tpu.memory_space<vmem>>, %arg2: memref<32x128xf32, #tpu.memory_space<vmem>>, %arg3: memref<1x128xf32, #tpu.memory_space<vmem>>, %arg4: memref<128x128xf32, #tpu.memory_space<vmem>>, %arg5: memref<1x128xf32, #tpu.memory_space<vmem>>, %arg6: memref<128x128xf32, #tpu.memory_space<vmem>>, %arg7: memref<1x128xf32, #tpu.memory_space<vmem>>, %arg8: memref<8x128xf32, #tpu.memory_space<vmem>>) attributes {dimension_semantics = [#tpu.dimension_semantics<parallel>], iteration_bounds = array<i64: 1>, scalar_prefetch = 0 : i64, scratch_operands = 0 : i64, tpu.core_type = #tpu.core_type<tc>, window_params = [{transform_indices = @transform_0, window_bounds = array<i64: 8, 32>}, {pipeline_mode = #tpu.pipeline_mode<synchronous>, transform_indices = @transform_1, window_bounds = array<i64: 32, 128>}, {pipeline_mode = #tpu.pipeline_mode<synchronous>, transform_indices = @transform_2, window_bounds = array<i64: 1, 128>}, {pipeline_mode = #tpu.pipeline_mode<synchronous>, transform_indices = @transform_3, window_bounds = array<i64: 128, 128>}, {pipeline_mode = #tpu.pipeline_mode<synchronous>, transform_indices = @transform_4, window_bounds = array<i64: 1, 128>}, {pipeline_mode = #tpu.pipeline_mode<synchronous>, transform_indices = @transform_5, window_bounds = array<i64: 128, 128>}, {pipeline_mode = #tpu.pipeline_mode<synchronous>, transform_indices = @transform_6, window_bounds = array<i64: 1, 128>}, {transform_indices = @transform_7, window_bounds = array<i64: 8, 128>}]} {
    %c0 = arith.constant 0 : index
    %c0_0 = arith.constant 0 : index
    %0 = vector.load %arg1[%c0, %c0_0] : memref<8x32xf32, #tpu.memory_space<vmem>>, vector<8x32xf32>
    %c0_1 = arith.constant 0 : index
    %c0_2 = arith.constant 0 : index
    %1 = vector.load %arg2[%c0_1, %c0_2] : memref<32x128xf32, #tpu.memory_space<vmem>>, vector<32x128xf32>
    %cst = arith.constant dense<0.000000e+00> : vector<8x128xf32>
    %2 = tpu.matmul %0, %1, %cst {dimension_numbers = #tpu.dot_dimension_numbers<[1], [0], [0], [1], [0, 0, 1, 1], [], []>} : vector<8x32xf32>, vector<32x128xf32>, vector<8x128xf32> -> vector<8x128xf32>
    %c0_3 = arith.constant 0 : index
    %c0_4 = arith.constant 0 : index
    %3 = vector.load %arg3[%c0_3, %c0_4] : memref<1x128xf32, #tpu.memory_space<vmem>>, vector<1x128xf32>
    %4 = vector.broadcast %3 : vector<1x128xf32> to vector<8x128xf32>
    %5 = arith.addf %2, %4 : vector<8x128xf32>
    %cst_5 = arith.constant 0.000000e+00 : f32
    %6 = vector.broadcast %cst_5 : f32 to vector<8x128xf32>
    %7 = arith.maximumf %5, %6 : vector<8x128xf32>
    %c0_6 = arith.constant 0 : index
    %c0_7 = arith.constant 0 : index
    %8 = vector.load %arg4[%c0_6, %c0_7] : memref<128x128xf32, #tpu.memory_space<vmem>>, vector<128x128xf32>
    %cst_8 = arith.constant dense<0.000000e+00> : vector<8x128xf32>
    %9 = tpu.matmul %7, %8, %cst_8 {dimension_numbers = #tpu.dot_dimension_numbers<[1], [0], [0], [1], [0, 0, 1, 1], [], []>} : vector<8x128xf32>, vector<128x128xf32>, vector<8x128xf32> -> vector<8x128xf32>
    %c0_9 = arith.constant 0 : index
    %c0_10 = arith.constant 0 : index
    %10 = vector.load %arg5[%c0_9, %c0_10] : memref<1x128xf32, #tpu.memory_space<vmem>>, vector<1x128xf32>
    %11 = vector.broadcast %10 : vector<1x128xf32> to vector<8x128xf32>
    %12 = arith.addf %9, %11 : vector<8x128xf32>
    %cst_11 = arith.constant 0.000000e+00 : f32
    %13 = vector.broadcast %cst_11 : f32 to vector<8x128xf32>
    %14 = arith.maximumf %12, %13 : vector<8x128xf32>
    %c0_12 = arith.constant 0 : index
    %c0_13 = arith.constant 0 : index
    %15 = vector.load %arg6[%c0_12, %c0_13] : memref<128x128xf32, #tpu.memory_space<vmem>>, vector<128x128xf32>
    %cst_14 = arith.constant dense<0.000000e+00> : vector<8x128xf32>
    %16 = tpu.matmul %14, %15, %cst_14 {dimension_numbers = #tpu.dot_dimension_numbers<[1], [0], [0], [1], [0, 0, 1, 1], [], []>} : vector<8x128xf32>, vector<128x128xf32>, vector<8x128xf32> -> vector<8x128xf32>
    %c0_15 = arith.constant 0 : index
    %c0_16 = arith.constant 0 : index
    %17 = vector.load %arg7[%c0_15, %c0_16] : memref<1x128xf32, #tpu.memory_space<vmem>>, vector<1x128xf32>
    %18 = vector.broadcast %17 : vector<1x128xf32> to vector<8x128xf32>
    %19 = arith.addf %16, %18 : vector<8x128xf32>
    %20 = tpu.iota {dimensions = array<i32: 1>} : vector<8x128xi32>
    %c8_i32 = arith.constant 8 : i32
    %21 = vector.broadcast %c8_i32 : i32 to vector<8x128xi32>
    %22 = arith.cmpi slt, %20, %21 : vector<8x128xi32>
    %cst_17 = arith.constant 0xFF800000 : f32
    %23 = vector.broadcast %cst_17 : f32 to vector<8x128xf32>
    %24 = arith.select %22, %19, %23 : vector<8x128xi1>, vector<8x128xf32>
    %cst_18 = arith.constant dense<0xFF800000> : vector<8xf32>
    %25 = vector.multi_reduction <maximumf>, %24, %cst_18 [1] : vector<8x128xf32> to vector<8xf32>
    %26 = vector.shape_cast %25 : vector<8xf32> to vector<8x1xf32>
    %27 = vector.broadcast %26 : vector<8x1xf32> to vector<8x128xf32>
    %28 = arith.subf %24, %27 : vector<8x128xf32>
    %29 = math.exp %28 : vector<8x128xf32>
    %cst_19 = arith.constant dense<0.000000e+00> : vector<8xf32>
    %30 = vector.multi_reduction <add>, %29, %cst_19 [1] : vector<8x128xf32> to vector<8xf32>
    %31 = vector.shape_cast %30 : vector<8xf32> to vector<8x1xf32>
    %32 = tpu.reciprocal %31 : vector<8x1xf32> -> vector<8x1xf32>
    %33 = vector.broadcast %32 : vector<8x1xf32> to vector<8x128xf32>
    %34 = arith.mulf %29, %33 : vector<8x128xf32>
    %c0_20 = arith.constant 0 : index
    %c0_21 = arith.constant 0 : index
    %35 = vector.load %arg8[%c0_20, %c0_21] : memref<8x128xf32, #tpu.memory_space<vmem>>, vector<8x128xf32>
    tpu.vector_store %arg8[%c0_20, %c0_21], %34 {strides = array<i32>} : memref<8x128xf32, #tpu.memory_space<vmem>>, vector<8x128xf32>,
    return
  }
  func.func @transform_0(%arg0: i32) -> (i32, i32) {
    %c0_i32 = arith.constant 0 : i32
    %c0_i32_0 = arith.constant 0 : i32
    return %arg0, %c0_i32 : i32, i32
  }
  func.func @transform_1(%arg0: i32) -> (i32, i32) {
    %c0_i32 = arith.constant 0 : i32
    %c0_i32_0 = arith.constant 0 : i32
    %c0_i32_1 = arith.constant 0 : i32
    return %c0_i32, %c0_i32_0 : i32, i32
  }
  func.func @transform_2(%arg0: i32) -> (i32, i32) {
    %c0_i32 = arith.constant 0 : i32
    %c0_i32_0 = arith.constant 0 : i32
    %c0_i32_1 = arith.constant 0 : i32
    return %c0_i32, %c0_i32_0 : i32, i32
  }
  func.func @transform_3(%arg0: i32) -> (i32, i32) {
    %c0_i32 = arith.constant 0 : i32
    %c0_i32_0 = arith.constant 0 : i32
    %c0_i32_1 = arith.constant 0 : i32
    return %c0_i32, %c0_i32_0 : i32, i32
  }
  func.func @transform_4(%arg0: i32) -> (i32, i32) {
    %c0_i32 = arith.constant 0 : i32
    %c0_i32_0 = arith.constant 0 : i32
    %c0_i32_1 = arith.constant 0 : i32
    return %c0_i32, %c0_i32_0 : i32, i32
  }
  func.func @transform_5(%arg0: i32) -> (i32, i32) {
    %c0_i32 = arith.constant 0 : i32
    %c0_i32_0 = arith.constant 0 : i32
    %c0_i32_1 = arith.constant 0 : i32
    return %c0_i32, %c0_i32_0 : i32, i32
  }
  func.func @transform_6(%arg0: i32) -> (i32, i32) {
    %c0_i32 = arith.constant 0 : i32
    %c0_i32_0 = arith.constant 0 : i32
    %c0_i32_1 = arith.constant 0 : i32
    return %c0_i32, %c0_i32_0 : i32, i32
  }
  func.func @transform_7(%arg0: i32) -> (i32, i32) {
    %c0_i32 = arith.constant 0 : i32
    %c0_i32_0 = arith.constant 0 : i32
    return %arg0, %c0_i32 : i32, i32
  }
}

</mosaic_0001>

<llo_original>
// kernel: tpu_custom_call.1
$region0: #{tpu_custom_call.1}
  #allocation0 [shape = 'u32[]', space=smem, size = 0x4, offset = 0x4, fixed_abs, tag = 'smem constant byte address 0x4 - core index']
  #allocation1 [shape = 'u32[72,128]{1,0:T(1,128)}', space=vmem, size = 0x9000, scoped, tag = 'internal scratch']
  %s0 = inlined_call_operand.hbm [shape: f32[8,32], index: 0, kind: input, shape index: {}]
  %s1 = inlined_call_operand.hbm [shape: f32[32,128], index: 1, kind: input, shape index: {}]
  %s2 = inlined_call_operand.vmem [shape: f32[1,128], index: 2, kind: input, shape index: {}]
  %s3 = inlined_call_operand.hbm [shape: f32[128,128], index: 3, kind: input, shape index: {}]
  %s4 = inlined_call_operand.vmem [shape: f32[1,128], index: 4, kind: input, shape index: {}]
  %s5 = inlined_call_operand.hbm [shape: f32[128,128], index: 5, kind: input, shape index: {}]
  %s6 = inlined_call_operand.vmem [shape: f32[1,128], index: 6, kind: input, shape index: {}]
  %s7 = inlined_call_operand.hbm [shape: f32[8,128], index: 7, kind: output, shape index: {}]
  %s8 = sld [smem:[#allocation0]]
  $region54: #{tpu_custom_call.1} parent=0
    _
  %s10 = ssub.s32 1, %s8
  %s11 = scalar_select 0, %s10, %s8
  $region1: #{tpu_custom_call.1} parent=0
    #allocation2 [shape = 'u8[4096]{0}', space=vmem, size = 0x1000, scoped, tag = 'input window, operand 0, single buffered']
    #allocation3 [shape = 's32[1]{0}', space=sflag, size = 0x4, scoped, tag = 'scoped memory for tpu_custom_call.1']
    #allocation4 [shape = 's32[1]{0}', space=sflag, size = 0x4, scoped, tag = 'scoped memory for tpu_custom_call.1']
    #allocation5 [shape = 'u8[16384]{0}', space=vmem, size = 0x4000, scoped, tag = 'input window, operand 1, single buffered']
    #allocation6 [shape = 's32[1]{0}', space=sflag, size = 0x4, scoped, tag = 'scoped memory for tpu_custom_call.1']
    #allocation7 [shape = 'u8[65536]{0}', space=vmem, size = 0x10000, scoped, tag = 'input window, operand 3, single buffered']
    #allocation8 [shape = 'u8[65536]{0}', space=vmem, size = 0x10000, scoped, tag = 'input window, operand 5, single buffered']
    #allocation9 [shape = 's32[1]{0}', space=sflag, size = 0x4, scoped, tag = 'scoped memory for tpu_custom_call.1']
    #allocation10 [shape = 'u8[4096]{0}', space=vmem, size = 0x1000, scoped, tag = 'output window, operand 0, single buffered']
    %12 = vsyncpa [#allocation3], 0
    %13 = vsyncpa [#allocation6], 0
    %14 = vsyncpa [#allocation9], 0
    %15 = vsyncpa [#allocation4], 0
    // Predicated region
    $region2: #{tpu_custom_call.1} parent=1 // pred_check
      _
    $region3: #{tpu_custom_call.1} parent=1 // pred_check_branch
      %17 = sbr.rel (0) target = $region5
    $region4: #{tpu_custom_call.1} parent=1 // pred_region
      %19 = vsyncadd [#allocation3], 0
      %s21 = sshll.u32 %s0, 4
      %s22 = int_to_ptr.hbm [resolvable:$true] %s21
      %s23 = sshll.u32 [#allocation2], 4
      %s24 = int_to_ptr.vmem [resolvable:$true] %s23
      %26 = dma.hbm_to_vmem [thread:$0]  %s22, 128, %s24, [#allocation3]
    $region5: #{tpu_custom_call.1} parent=1 // pred_fallthru
      _
    // Predicated region
    $region6: #{tpu_custom_call.1} parent=1 // pred_check
      _
    $region7: #{tpu_custom_call.1} parent=1 // pred_check_branch
      %28 = sbr.rel (0) target = $region9
    $region8: #{tpu_custom_call.1} parent=1 // pred_region
      %30 = vsyncadd [#allocation6], 0
      %s31 = sshll.u32 %s1, 4
      %s32 = int_to_ptr.hbm [resolvable:$true] %s31
      %s33 = sshll.u32 [#allocation5], 4
      %s34 = int_to_ptr.vmem [resolvable:$true] %s33
      %39 = dma.hbm_to_vmem [thread:$0]  %s32, 512, %s34, [#allocation6], 128, 128, 8
    $region9: #{tpu_custom_call.1} parent=1 // pred_fallthru
      _
    // Predicated region
    $region10: #{tpu_custom_call.1} parent=1 // pred_check
      _
    $region11: #{tpu_custom_call.1} parent=1 // pred_check_branch
      %41 = sbr.rel (0) target = $region13
    $region12: #{tpu_custom_call.1} parent=1 // pred_region
      _
    $region13: #{tpu_custom_call.1} parent=1 // pred_fallthru
      _
    // Predicated region
    $region14: #{tpu_custom_call.1} parent=1 // pred_check
      _
    $region15: #{tpu_custom_call.1} parent=1 // pred_check_branch
      %43 = sbr.rel (0) target = $region17
    $region16: #{tpu_custom_call.1} parent=1 // pred_region
      %45 = vsyncadd [#allocation6], 0
      %s46 = sshll.u32 %s3, 4
      %s47 = int_to_ptr.hbm [resolvable:$true] %s46
      %s48 = sshll.u32 [#allocation7], 4
      %s49 = int_to_ptr.vmem [resolvable:$true] %s48
      %54 = dma.hbm_to_vmem [thread:$0]  %s47, 2048, %s49, [#allocation6], 128, 128, 8
    $region17: #{tpu_custom_call.1} parent=1 // pred_fallthru
      _
    // Predicated region
    $region18: #{tpu_custom_call.1} parent=1 // pred_check
      _
    $region19: #{tpu_custom_call.1} parent=1 // pred_check_branch
      %56 = sbr.rel (0) target = $region21
    $region20: #{tpu_custom_call.1} parent=1 // pred_region
      _
    $region21: #{tpu_custom_call.1} parent=1 // pred_fallthru
      _
    // Predicated region
    $region22: #{tpu_custom_call.1} parent=1 // pred_check
      _
    $region23: #{tpu_custom_call.1} parent=1 // pred_check_branch
      %58 = sbr.rel (0) target = $region25
    $region24: #{tpu_custom_call.1} parent=1 // pred_region
      %60 = vsyncadd [#allocation9], 0
      %s61 = sshll.u32 %s5, 4
      %s62 = int_to_ptr.hbm [resolvable:$true] %s61
      %s63 = sshll.u32 [#allocation8], 4
      %s64 = int_to_ptr.vmem [resolvable:$true] %s63
      %69 = dma.hbm_to_vmem [thread:$0]  %s62, 2048, %s64, [#allocation9], 128, 128, 8
    $region25: #{tpu_custom_call.1} parent=1 // pred_fallthru
      _
    // Predicated region
    $region26: #{tpu_custom_call.1} parent=1 // pred_check
      _
    $region27: #{tpu_custom_call.1} parent=1 // pred_check_branch
      %71 = sbr.rel (0) target = $region29
    $region28: #{tpu_custom_call.1} parent=1 // pred_region
      _
    $region29: #{tpu_custom_call.1} parent=1 // pred_fallthru
      _
    // Predicated region
    $region30: #{tpu_custom_call.1} parent=1 // pred_check
      _
    $region31: #{tpu_custom_call.1} parent=1 // pred_check_branch
      %73 = sbr.rel (0) target = $region33
    $region32: #{tpu_custom_call.1} parent=1 // pred_region
      %75 = dma.done [#allocation3], 128
    $region33: #{tpu_custom_call.1} parent=1 // pred_fallthru
      _
    // Predicated region
    $region34: #{tpu_custom_call.1} parent=1 // pred_check
      _
    $region35: #{tpu_custom_call.1} parent=1 // pred_check_branch
      %77 = sbr.rel (0) target = $region37
    $region36: #{tpu_custom_call.1} parent=1 // pred_region
      %79 = dma.done [#allocation6], 512
    $region37: #{tpu_custom_call.1} parent=1 // pred_fallthru
      _
    // Predicated region
    $region38: #{tpu_custom_call.1} parent=1 // pred_check
      _
    $region39: #{tpu_custom_call.1} parent=1 // pred_check_branch
      %81 = sbr.rel (0) target = $region41
    $region40: #{tpu_custom_call.1} parent=1 // pred_region
      %83 = dma.done [#allocation6], 2048
    $region41: #{tpu_custom_call.1} parent=1 // pred_fallthru
      _
    // Predicated region
    $region42: #{tpu_custom_call.1} parent=1 // pred_check
      _
    $region43: #{tpu_custom_call.1} parent=1 // pred_check_branch
      %85 = sbr.rel (0) target = $region45
    $region44: #{tpu_custom_call.1} parent=1 // pred_region
      %87 = dma.done [#allocation9], 2048
    $region45: #{tpu_custom_call.1} parent=1 // pred_fallthru
      _
    %v88 = vld [vmem:[#allocation2] sm:$0xff]
    %v89 = vld [vmem:[#allocation5] sm:$0xff]
    %v90 = vld [vmem:[#allocation5 + $0x8] sm:$0xff]
    %v91 = vld [vmem:[#allocation5 + $0x10] sm:$0xff]
    %v92 = vld [vmem:[#allocation5 + $0x18] sm:$0xff]
    %v93 = vld [vmem:[%s2] sm:$0x1]
    %v95 = vperm.slane %v93, 0
    %vm97 = vcmask 261120
    %v99 = vsel %vm97, %v88, 0
    %101 = vmatpush.msra.mxu0 0.0
    %102 = vmatpush.msra.mxu0 0.0
    %103 = vmatpush.msra.mxu0 0.0
    %104 = vmatpush.msra.mxu0 0.0
    %105 = vmatpush.msra.mxu0 0.0
    %106 = vmatpush.msra.mxu0 0.0
    %107 = vmatpush.msra.mxu0 0.0
    %108 = vmatpush.msra.mxu0 0.0
    %109 = vmatpush.msra.mxu0 0.0
    %110 = vmatpush.msra.mxu0 0.0
    %111 = vmatpush.msra.mxu0 0.0
    %112 = vmatpush.msra.mxu0 0.0
    %113 = vmatpush.msra.mxu0 %v92
    %114 = vmatpush.msra.mxu0 %v91
    %115 = vmatpush.msra.mxu0 %v90
    %116 = vmatpush.msra.mxu0 %v89
    %117 = vmatmul.f32.gmra.mxu0 %v99
    %v118 = vpop.f32.mrf.mxu0
    %v119 = vadd.f32 %v95, %v118
    %120 = vdwg.mxu0
    %v121 = vmax.f32 %v119, 0.0
    %v122 = vld [vmem:[#allocation7] sm:$0xff]
    %v123 = vld [vmem:[#allocation7 + $0x8] sm:$0xff]
    %v124 = vld [vmem:[#allocation7 + $0x10] sm:$0xff]
    %v125 = vld [vmem:[#allocation7 + $0x18] sm:$0xff]
    %v126 = vld [vmem:[#allocation7 + $0x20] sm:$0xff]
    %v127 = vld [vmem:[#allocation7 + $0x28] sm:$0xff]
    %v128 = vld [vmem:[#allocation7 + $0x30] sm:$0xff]
    %v129 = vld [vmem:[#allocation7 + $0x38] sm:$0xff]
    %v130 = vld [vmem:[#allocation7 + $0x40] sm:$0xff]
    %v131 = vld [vmem:[#allocation7 + $0x48] sm:$0xff]
    %v132 = vld [vmem:[#allocation7 + $0x50] sm:$0xff]
    %v133 = vld [vmem:[#allocation7 + $0x58] sm:$0xff]
    %v134 = vld [vmem:[#allocation7 + $0x60] sm:$0xff]
    %v135 = vld [vmem:[#allocation7 + $0x68] sm:$0xff]
    %v136 = vld [vmem:[#allocation7 + $0x70] sm:$0xff]
    %v137 = vld [vmem:[#allocation7 + $0x78] sm:$0xff]
    %v138 = vld [vmem:[%s4] sm:$0x1]
    %v140 = vperm.slane %v138, 0
    %142 = vmatpush.msra.mxu0 %v137
    %143 = vmatpush.msra.mxu0 %v136
    %144 = vmatpush.msra.mxu0 %v135
    %145 = vmatpush.msra.mxu0 %v134
    %146 = vmatpush.msra.mxu0 %v133
    %147 = vmatpush.msra.mxu0 %v132
    %148 = vmatpush.msra.mxu0 %v131
    %149 = vmatpush.msra.mxu0 %v130
    %150 = vmatpush.msra.mxu0 %v129
    %151 = vmatpush.msra.mxu0 %v128
    %152 = vmatpush.msra.mxu0 %v127
    %153 = vmatpush.msra.mxu0 %v126
    %154 = vmatpush.msra.mxu0 %v125
    %155 = vmatpush.msra.mxu0 %v124
    %156 = vmatpush.msra.mxu0 %v123
    %157 = vmatpush.msra.mxu0 %v122
    %158 = vmatmul.f32.gmra.mxu0 %v121
    %v159 = vpop.f32.mrf.mxu0
    %v160 = vadd.f32 %v140, %v159
    %161 = vdwg.mxu0
    %v162 = vmax.f32 %v160, 0.0
    %v163 = vld [vmem:[#allocation8] sm:$0xff]
    %v164 = vld [vmem:[#allocation8 + $0x8] sm:$0xff]
    %v165 = vld [vmem:[#allocation8 + $0x10] sm:$0xff]
    %v166 = vld [vmem:[#allocation8 + $0x18] sm:$0xff]
    %v167 = vld [vmem:[#allocation8 + $0x20] sm:$0xff]
    %v168 = vld [vmem:[#allocation8 + $0x28] sm:$0xff]
    %v169 = vld [vmem:[#allocation8 + $0x30] sm:$0xff]
    %v170 = vld [vmem:[#allocation8 + $0x38] sm:$0xff]
    %v171 = vld [vmem:[#allocation8 + $0x40] sm:$0xff]
    %v172 = vld [vmem:[#allocation8 + $0x48] sm:$0xff]
    %v173 = vld [vmem:[#allocation8 + $0x50] sm:$0xff]
    %v174 = vld [vmem:[#allocation8 + $0x58] sm:$0xff]
    %v175 = vld [vmem:[#allocation8 + $0x60] sm:$0xff]
    %v176 = vld [vmem:[#allocation8 + $0x68] sm:$0xff]
    %v177 = vld [vmem:[#allocation8 + $0x70] sm:$0xff]
    %v178 = vld [vmem:[#allocation8 + $0x78] sm:$0xff]
    %v179 = vld [vmem:[%s6] sm:$0x1]
    %v181 = vperm.slane %v179, 0
    %183 = vmatpush.msra.mxu0 %v178
    %184 = vmatpush.msra.mxu0 %v177
    %185 = vmatpush.msra.mxu0 %v176
    %186 = vmatpush.msra.mxu0 %v175
    %187 = vmatpush.msra.mxu0 %v174
    %188 = vmatpush.msra.mxu0 %v173
    %189 = vmatpush.msra.mxu0 %v172
    %190 = vmatpush.msra.mxu0 %v171
    %191 = vmatpush.msra.mxu0 %v170
    %192 = vmatpush.msra.mxu0 %v169
    %193 = vmatpush.msra.mxu0 %v168
    %194 = vmatpush.msra.mxu0 %v167
    %195 = vmatpush.msra.mxu0 %v166
    %196 = vmatpush.msra.mxu0 %v165
    %197 = vmatpush.msra.mxu0 %v164
    %198 = vmatpush.msra.mxu0 %v163
    %199 = vmatmul.f32.gmra.mxu0 %v162
    %v200 = vpop.f32.mrf.mxu0
    %v201 = vadd.f32 %v181, %v200
    %202 = vdwg.mxu0
    %v203 = vlaneseq
    %v204 = vand.u32 %v203, 127
    %vm205 = vcmp.lt.s32.totalorder %v204, 8
    %v206 = vsel %vm205, %v201, -inf
    %207 = vmax.xlane.f32.xlu0 %v206
    %v208 = vpop.xlane.xlu0 %207
    %v209 = vsub.f32 %v206, %v208
    %v210 = vmul.f32 %v209, 1.442695
    %v211 = vpow.pop %v210
    %212 = vadd.xlane.f32.xlu0 %v211
    %v213 = vpop.xlane.xlu0 %212
    %v214 = vrcp.pop %v213
    %v215 = vmul.f32 %v213, %v214
    %v216 = vsub.f32 1.0, %v215
    %v217 = vmul.f32 %v214, %v216
    %v218 = vadd.f32 %v214, %v217
    %vm219 = vweird.f32 %v213
    %vm220 = vweird.f32 %v214
    %vm221 = vmor %vm219, %vm220
    %v222 = vsel %vm221, %v214, %v218
    %v223 = vand.u32 2147483647, %v213
    %vm224 = vcmp.eq.f32.partialorder %v223, 8.507059e+37
    %v225 = vand.u32 %v213, 2147483648
    %v226 = vor.u32 1.1754944e-38, %v225
    %v227 = vsel %vm224, %v226, %v222
    %v228 = vmul.f32 %v211, %v227
    %229 = vst [vmem:[#allocation10] sm:$0xff] %v228
    // Predicated region
    $region46: #{tpu_custom_call.1} parent=1 // pred_check
      _
    $region47: #{tpu_custom_call.1} parent=1 // pred_check_branch
      %231 = sbr.rel (0) target = $region49
    $region48: #{tpu_custom_call.1} parent=1 // pred_region
      %233 = vsyncadd [#allocation4], 0
      %s235 = sshll.u32 [#allocation10], 4
      %s236 = int_to_ptr.vmem [resolvable:$true] %s235
      %s237 = sshll.u32 %s7, 4
      %s238 = int_to_ptr.hbm [resolvable:$true] %s237
      %240 = dma.vmem_to_hbm [thread:$0]  %s236, 128, %s238, [#allocation4]
    $region49: #{tpu_custom_call.1} parent=1 // pred_fallthru
      _
    // Predicated region
    $region50: #{tpu_custom_call.1} parent=1 // pred_check
      _
    $region51: #{tpu_custom_call.1} parent=1 // pred_check_branch
      %242 = sbr.rel (0) target = $region53
    $region52: #{tpu_custom_call.1} parent=1 // pred_region
      %244 = dma.done [#allocation4], 128
    $region53: #{tpu_custom_call.1} parent=1 // pred_fallthru
      _
    %245 = vsyncpa [#allocation3], 1
    %246 = vsyncpa [#allocation6], 1
    %247 = vsyncpa [#allocation9], 1
    %248 = vsyncpa [#allocation4], 1

// kernel: tpu_custom_call.1
$region0: #{tpu_custom_call.1}
  #allocation0 [shape = 'u32[]', space=smem, size = 0x4, offset = 0x4, fixed_abs, tag = 'smem constant byte address 0x4 - core index']
  #allocation1 [shape = 'u32[72,128]{1,0:T(1,128)}', space=vmem, size = 0x9000, scoped, tag = 'internal scratch']
  %s0 = inlined_call_operand.hbm [shape: f32[8,32], index: 0, kind: input, shape index: {}]
  %s1 = inlined_call_operand.hbm [shape: f32[32,128], index: 1, kind: input, shape index: {}]
  %s2 = inlined_call_operand.vmem [shape: f32[1,128], index: 2, kind: input, shape index: {}]
  %s3 = inlined_call_operand.hbm [shape: f32[128,128], index: 3, kind: input, shape index: {}]
  %s4 = inlined_call_operand.vmem [shape: f32[1,128], index: 4, kind: input, shape index: {}]
  %s5 = inlined_call_operand.hbm [shape: f32[128,128], index: 5, kind: input, shape index: {}]
  %s6 = inlined_call_operand.vmem [shape: f32[1,128], index: 6, kind: input, shape index: {}]
  %s7 = inlined_call_operand.hbm [shape: f32[8,128], index: 7, kind: output, shape index: {}]
  %s8 = sld [smem:[#allocation0]]
  $region54: #{tpu_custom_call.1} parent=0
    _
  %s10 = ssub.s32 1, %s8
  %s11 = scalar_select 0, %s10, %s8
  $region1: #{tpu_custom_call.1} parent=0
    #allocation2 [shape = 'u8[4096]{0}', space=vmem, size = 0x1000, scoped, tag = 'input window, operand 0, single buffered']
    #allocation3 [shape = 's32[1]{0}', space=sflag, size = 0x4, scoped, tag = 'scoped memory for tpu_custom_call.1']
    #allocation4 [shape = 's32[1]{0}', space=sflag, size = 0x4, scoped, tag = 'scoped memory for tpu_custom_call.1']
    #allocation5 [shape = 'u8[16384]{0}', space=vmem, size = 0x4000, scoped, tag = 'input window, operand 1, single buffered']
    #allocation6 [shape = 's32[1]{0}', space=sflag, size = 0x4, scoped, tag = 'scoped memory for tpu_custom_call.1']
    #allocation7 [shape = 'u8[65536]{0}', space=vmem, size = 0x10000, scoped, tag = 'input window, operand 3, single buffered']
    #allocation8 [shape = 'u8[65536]{0}', space=vmem, size = 0x10000, scoped, tag = 'input window, operand 5, single buffered']
    #allocation9 [shape = 's32[1]{0}', space=sflag, size = 0x4, scoped, tag = 'scoped memory for tpu_custom_call.1']
    #allocation10 [shape = 'u8[4096]{0}', space=vmem, size = 0x1000, scoped, tag = 'output window, operand 0, single buffered']
    %12 = vsyncpa [#allocation3], 0
    %13 = vsyncpa [#allocation6], 0
    %14 = vsyncpa [#allocation9], 0
    %15 = vsyncpa [#allocation4], 0
    // Predicated region
    $region2: #{tpu_custom_call.1} parent=1 // pred_check
      _
    $region3: #{tpu_custom_call.1} parent=1 // pred_check_branch
      %17 = sbr.rel (0) target = $region5
    $region4: #{tpu_custom_call.1} parent=1 // pred_region
      %19 = vsyncadd [#allocation3], 0
      %s21 = sshll.u32 %s0, 4
      %s22 = int_to_ptr.hbm [resolvable:$true] %s21
      %s23 = sshll.u32 [#allocation2], 4
      %s24 = int_to_ptr.vmem [resolvable:$true] %s23
      %26 = dma.hbm_to_vmem [thread:$0]  %s22, 128, %s24, [#allocation3]
    $region5: #{tpu_custom_call.1} parent=1 // pred_fallthru
      _
    // Predicated region
    $region6: #{tpu_custom_call.1} parent=1 // pred_check
      _
    $region7: #{tpu_custom_call.1} parent=1 // pred_check_branch
      %28 = sbr.rel (0) target = $region9
    $region8: #{tpu_custom_call.1} parent=1 // pred_region
      %30 = vsyncadd [#allocation6], 0
      %s31 = sshll.u32 %s1, 4
      %s32 = int_to_ptr.hbm [resolvable:$true] %s31
      %s33 = sshll.u32 [#allocation5], 4
      %s34 = int_to_ptr.vmem [resolvable:$true] %s33
      %39 = dma.hbm_to_vmem [thread:$0]  %s32, 512, %s34, [#allocation6], 128, 128, 8
    $region9: #{tpu_custom_call.1} parent=1 // pred_fallthru
      _
    // Predicated region
    $region10: #{tpu_custom_call.1} parent=1 // pred_check
      _
    $region11: #{tpu_custom_call.1} parent=1 // pred_check_branch
      %41 = sbr.rel (0) target = $region13
    $region12: #{tpu_custom_call.1} parent=1 // pred_region
      _
    $region13: #{tpu_custom_call.1} parent=1 // pred_fallthru
      _
    // Predicated region
    $region14: #{tpu_custom_call.1} parent=1 // pred_check
      _
    $region15: #{tpu_custom_call.1} parent=1 // pred_check_branch
      %43 = sbr.rel (0) target = $region17
    $region16: #{tpu_custom_call.1} parent=1 // pred_region
      %45 = vsyncadd [#allocation6], 0
      %s46 = sshll.u32 %s3, 4
      %s47 = int_to_ptr.hbm [resolvable:$true] %s46
      %s48 = sshll.u32 [#allocation7], 4
      %s49 = int_to_ptr.vmem [resolvable:$true] %s48
      %54 = dma.hbm_to_vmem [thread:$0]  %s47, 2048, %s49, [#allocation6], 128, 128, 8
    $region17: #{tpu_custom_call.1} parent=1 // pred_fallthru
      _
    // Predicated region
    $region18: #{tpu_custom_call.1} parent=1 // pred_check
      _
    $region19: #{tpu_custom_call.1} parent=1 // pred_check_branch
      %56 = sbr.rel (0) target = $region21
    $region20: #{tpu_custom_call.1} parent=1 // pred_region
      _
    $region21: #{tpu_custom_call.1} parent=1 // pred_fallthru
      _
    // Predicated region
    $region22: #{tpu_custom_call.1} parent=1 // pred_check
      _
    $region23: #{tpu_custom_call.1} parent=1 // pred_check_branch
      %58 = sbr.rel (0) target = $region25
    $region24: #{tpu_custom_call.1} parent=1 // pred_region
      %60 = vsyncadd [#allocation9], 0
      %s61 = sshll.u32 %s5, 4
      %s62 = int_to_ptr.hbm [resolvable:$true] %s61
      %s63 = sshll.u32 [#allocation8], 4
      %s64 = int_to_ptr.vmem [resolvable:$true] %s63
      %69 = dma.hbm_to_vmem [thread:$0]  %s62, 2048, %s64, [#allocation9], 128, 128, 8
    $region25: #{tpu_custom_call.1} parent=1 // pred_fallthru
      _
    // Predicated region
    $region26: #{tpu_custom_call.1} parent=1 // pred_check
      _
    $region27: #{tpu_custom_call.1} parent=1 // pred_check_branch
      %71 = sbr.rel (0) target = $region29
    $region28: #{tpu_custom_call.1} parent=1 // pred_region
      _
    $region29: #{tpu_custom_call.1} parent=1 // pred_fallthru
      _
    // Predicated region
    $region30: #{tpu_custom_call.1} parent=1 // pred_check
      _
    $region31: #{tpu_custom_call.1} parent=1 // pred_check_branch
      %73 = sbr.rel (0) target = $region33
    $region32: #{tpu_custom_call.1} parent=1 // pred_region
      %75 = dma.done [#allocation3], 128
    $region33: #{tpu_custom_call.1} parent=1 // pred_fallthru
      _
    // Predicated region
    $region34: #{tpu_custom_call.1} parent=1 // pred_check
      _
    $region35: #{tpu_custom_call.1} parent=1 // pred_check_branch
      %77 = sbr.rel (0) target = $region37
    $region36: #{tpu_custom_call.1} parent=1 // pred_region
      %79 = dma.done [#allocation6], 512
    $region37: #{tpu_custom_call.1} parent=1 // pred_fallthru
      _
    // Predicated region
    $region38: #{tpu_custom_call.1} parent=1 // pred_check
      _
    $region39: #{tpu_custom_call.1} parent=1 // pred_check_branch
      %81 = sbr.rel (0) target = $region41
    $region40: #{tpu_custom_call.1} parent=1 // pred_region
      %83 = dma.done [#allocation6], 2048
    $region41: #{tpu_custom_call.1} parent=1 // pred_fallthru
      _
    // Predicated region
    $region42: #{tpu_custom_call.1} parent=1 // pred_check
      _
    $region43: #{tpu_custom_call.1} parent=1 // pred_check_branch
      %85 = sbr.rel (0) target = $region45
    $region44: #{tpu_custom_call.1} parent=1 // pred_region
      %87 = dma.done [#allocation9], 2048
    $region45: #{tpu_custom_call.1} parent=1 // pred_fallthru
      _
    %v88 = vld [vmem:[#allocation2] sm:$0xff]
    %v89 = vld [vmem:[#allocation5] sm:$0xff]
    %v90 = vld [vmem:[#allocation5 + $0x8] sm:$0xff]
    %v91 = vld [vmem:[#allocation5 + $0x10] sm:$0xff]
    %v92 = vld [vmem:[#allocation5 + $0x18] sm:$0xff]
    %v93 = vld [vmem:[%s2] sm:$0x1]
    %v95 = vperm.slane %v93, 0
    %vm97 = vcmask 261120
    %v99 = vsel %vm97, %v88, 0
    %101 = vmatpush.msra.mxu0 0.0
    %102 = vmatpush.msra.mxu0 0.0
    %103 = vmatpush.msra.mxu0 0.0
    %104 = vmatpush.msra.mxu0 0.0
    %105 = vmatpush.msra.mxu0 0.0
    %106 = vmatpush.msra.mxu0 0.0
    %107 = vmatpush.msra.mxu0 0.0
    %108 = vmatpush.msra.mxu0 0.0
    %109 = vmatpush.msra.mxu0 0.0
    %110 = vmatpush.msra.mxu0 0.0
    %111 = vmatpush.msra.mxu0 0.0
    %112 = vmatpush.msra.mxu0 0.0
    %113 = vmatpush.msra.mxu0 %v92
    %114 = vmatpush.msra.mxu0 %v91
    %115 = vmatpush.msra.mxu0 %v90
    %116 = vmatpush.msra.mxu0 %v89
    %117 = vmatmul.f32.gmra.mxu0 %v99
    %v118 = vpop.f32.mrf.mxu0
    %v119 = vadd.f32 %v95, %v118
    %120 = vdwg.mxu0
    %v121 = vmax.f32 %v119, 0.0
    %v122 = vld [vmem:[#allocation7] sm:$0xff]
    %v123 = vld [vmem:[#allocation7 + $0x8] sm:$0xff]
    %v124 = vld [vmem:[#allocation7 + $0x10] sm:$0xff]
    %v125 = vld [vmem:[#allocation7 + $0x18] sm:$0xff]
    %v126 = vld [vmem:[#allocation7 + $0x20] sm:$0xff]
    %v127 = vld [vmem:[#allocation7 + $0x28] sm:$0xff]
    %v128 = vld [vmem:[#allocation7 + $0x30] sm:$0xff]
    %v129 = vld [vmem:[#allocation7 + $0x38] sm:$0xff]
    %v130 = vld [vmem:[#allocation7 + $0x40] sm:$0xff]
    %v131 = vld [vmem:[#allocation7 + $0x48] sm:$0xff]
    %v132 = vld [vmem:[#allocation7 + $0x50] sm:$0xff]
    %v133 = vld [vmem:[#allocation7 + $0x58] sm:$0xff]
    %v134 = vld [vmem:[#allocation7 + $0x60] sm:$0xff]
    %v135 = vld [vmem:[#allocation7 + $0x68] sm:$0xff]
    %v136 = vld [vmem:[#allocation7 + $0x70] sm:$0xff]
    %v137 = vld [vmem:[#allocation7 + $0x78] sm:$0xff]
    %v138 = vld [vmem:[%s4] sm:$0x1]
    %v140 = vperm.slane %v138, 0
    %142 = vmatpush.msra.mxu0 %v137
    %143 = vmatpush.msra.mxu0 %v136
    %144 = vmatpush.msra.mxu0 %v135
    %145 = vmatpush.msra.mxu0 %v134
    %146 = vmatpush.msra.mxu0 %v133
    %147 = vmatpush.msra.mxu0 %v132
    %148 = vmatpush.msra.mxu0 %v131
    %149 = vmatpush.msra.mxu0 %v130
    %150 = vmatpush.msra.mxu0 %v129
    %151 = vmatpush.msra.mxu0 %v128
    %152 = vmatpush.msra.mxu0 %v127
    %153 = vmatpush.msra.mxu0 %v126
    %154 = vmatpush.msra.mxu0 %v125
    %155 = vmatpush.msra.mxu0 %v124
    %156 = vmatpush.msra.mxu0 %v123
    %157 = vmatpush.msra.mxu0 %v122
    %158 = vmatmul.f32.gmra.mxu0 %v121
    %v159 = vpop.f32.mrf.mxu0
    %v160 = vadd.f32 %v140, %v159
    %161 = vdwg.mxu0
    %v162 = vmax.f32 %v160, 0.0
    %v163 = vld [vmem:[#allocation8] sm:$0xff]
    %v164 = vld [vmem:[#allocation8 + $0x8] sm:$0xff]
    %v165 = vld [vmem:[#allocation8 + $0x10] sm:$0xff]
    %v166 = vld [vmem:[#allocation8 + $0x18] sm:$0xff]
    %v167 = vld [vmem:[#allocation8 + $0x20] sm:$0xff]
    %v168 = vld [vmem:[#allocation8 + $0x28] sm:$0xff]
    %v169 = vld [vmem:[#allocation8 + $0x30] sm:$0xff]
    %v170 = vld [vmem:[#allocation8 + $0x38] sm:$0xff]
    %v171 = vld [vmem:[#allocation8 + $0x40] sm:$0xff]
    %v172 = vld [vmem:[#allocation8 + $0x48] sm:$0xff]
    %v173 = vld [vmem:[#allocation8 + $0x50] sm:$0xff]
    %v174 = vld [vmem:[#allocation8 + $0x58] sm:$0xff]
    %v175 = vld [vmem:[#allocation8 + $0x60] sm:$0xff]
    %v176 = vld [vmem:[#allocation8 + $0x68] sm:$0xff]
    %v177 = vld [vmem:[#allocation8 + $0x70] sm:$0xff]
    %v178 = vld [vmem:[#allocation8 + $0x78] sm:$0xff]
    %v179 = vld [vmem:[%s6] sm:$0x1]
    %v181 = vperm.slane %v179, 0
    %183 = vmatpush.msra.mxu0 %v178
    %184 = vmatpush.msra.mxu0 %v177
    %185 = vmatpush.msra.mxu0 %v176
    %186 = vmatpush.msra.mxu0 %v175
    %187 = vmatpush.msra.mxu0 %v174
    %188 = vmatpush.msra.mxu0 %v173
    %189 = vmatpush.msra.mxu0 %v172
    %190 = vmatpush.msra.mxu0 %v171
    %191 = vmatpush.msra.mxu0 %v170
    %192 = vmatpush.msra.mxu0 %v169
    %193 = vmatpush.msra.mxu0 %v168
    %194 = vmatpush.msra.mxu0 %v167
    %195 = vmatpush.msra.mxu0 %v166
    %196 = vmatpush.msra.mxu0 %v165
    %197 = vmatpush.msra.mxu0 %v164
    %198 = vmatpush.msra.mxu0 %v163
    %199 = vmatmul.f32.gmra.mxu0 %v162
    %v200 = vpop.f32.mrf.mxu0
    %v201 = vadd.f32 %v181, %v200
    %202 = vdwg.mxu0
    %v203 = vlaneseq
    %v204 = vand.u32 %v203, 127
    %vm205 = vcmp.lt.s32.totalorder %v204, 8
    %v206 = vsel %vm205, %v201, -inf
    %207 = vmax.xlane.f32.xlu0 %v206
    %v208 = vpop.xlane.xlu0 %207
    %v209 = vsub.f32 %v206, %v208
    %v210 = vmul.f32 %v209, 1.442695
    %v211 = vpow.pop %v210
    %212 = vadd.xlane.f32.xlu0 %v211
    %v213 = vpop.xlane.xlu0 %212
    %v214 = vrcp.pop %v213
    %v215 = vmul.f32 %v213, %v214
    %v216 = vsub.f32 1.0, %v215
    %v217 = vmul.f32 %v214, %v216
    %v218 = vadd.f32 %v214, %v217
    %vm219 = vweird.f32 %v213
    %vm220 = vweird.f32 %v214
    %vm221 = vmor %vm219, %vm220
    %v222 = vsel %vm221, %v214, %v218
    %v223 = vand.u32 2147483647, %v213
    %vm224 = vcmp.eq.f32.partialorder %v223, 8.507059e+37
    %v225 = vand.u32 %v213, 2147483648
    %v226 = vor.u32 1.1754944e-38, %v225
    %v227 = vsel %vm224, %v226, %v222
    %v228 = vmul.f32 %v211, %v227
    %229 = vst [vmem:[#allocation10] sm:$0xff] %v228
    // Predicated region
    $region46: #{tpu_custom_call.1} parent=1 // pred_check
      _
    $region47: #{tpu_custom_call.1} parent=1 // pred_check_branch
      %231 = sbr.rel (0) target = $region49
    $region48: #{tpu_custom_call.1} parent=1 // pred_region
      %233 = vsyncadd [#allocation4], 0
      %s235 = sshll.u32 [#allocation10], 4
      %s236 = int_to_ptr.vmem [resolvable:$true] %s235
      %s237 = sshll.u32 %s7, 4
      %s238 = int_to_ptr.hbm [resolvable:$true] %s237
      %240 = dma.vmem_to_hbm [thread:$0]  %s236, 128, %s238, [#allocation4]
    $region49: #{tpu_custom_call.1} parent=1 // pred_fallthru
      _
    // Predicated region
    $region50: #{tpu_custom_call.1} parent=1 // pred_check
      _
    $region51: #{tpu_custom_call.1} parent=1 // pred_check_branch
      %242 = sbr.rel (0) target = $region53
    $region52: #{tpu_custom_call.1} parent=1 // pred_region
      %244 = dma.done [#allocation4], 128
    $region53: #{tpu_custom_call.1} parent=1 // pred_fallthru
      _
    %245 = vsyncpa [#allocation3], 1
    %246 = vsyncpa [#allocation6], 1
    %247 = vsyncpa [#allocation9], 1
    %248 = vsyncpa [#allocation4], 1

</llo_original>
